<compile_context>
chip_gen: v5e
topology: v5e:2x2
jax: 0.10.0
libtpu: 0.0.40
codegen_flags: <defaults>
</compile_context>

<pallas_src>
import functools

import jax
import jax.numpy as jnp
from jax.experimental import pallas as pl
from jax.experimental.pallas import tpu as pltpu


def _round_up(x, m):
    return ((x + m - 1) // m) * m


def _linear_svm_kernel(x_ref, w_ref, b_ref, o_ref, *, num_class):
    # x_ref: (TM, D)       VMEM  streamed per grid step (double-buffered)
    # w_ref: (D, C_pad)    VMEM  resident across grid steps, already transposed
    # b_ref: (1, C_pad)    VMEM  resident
    # o_ref: (TM, C)       VMEM  unpadded output tile (C = true num_class)
    acc = jnp.dot(x_ref[...], w_ref[...], preferred_element_type=jnp.float32)
    acc = acc + b_ref[...]
    o_ref[...] = acc[:, :num_class].astype(o_ref.dtype)


def linear_svm_forward(x, weight, bias, *, tm=1024):
    """h = x @ weight.T + bias  (PyTorch nn.Linear semantics).

    x:      [B, D] float32
    weight: [C, D] float32   (PyTorch layout)
    bias:   [C]    float32
    returns [B, C] float32
    """
    B, D = x.shape
    C = weight.shape[0]
    itemsize = jnp.dtype(x.dtype).itemsize

    # --- Parameters: transpose once, pad class dim to a 128-lane multiple ----
    C_pad = _round_up(max(C, 128), 128)
    w_t = weight.T  # (D, C)
    if C_pad != C:
        w_p = jnp.zeros((D, C_pad), weight.dtype).at[:, :C].set(w_t)
        b_p = jnp.zeros((1, C_pad), bias.dtype).at[0, :C].set(bias)
    else:
        w_p = w_t
        b_p = bias.reshape(1, C_pad)

    # --- Batch tile size from an explicit VMEM budget --------------------------
    # Working set: 2x x-tile + 2x out-tile (double-buffered) + 2x (weight+bias)
    # + f32 accumulator.  ~28 MiB budget is safe on all generations (v7x has
    # only 64 MiB VMEM per TensorCore).
    block_budget = 28 * (1 << 20)
    weight_bytes = 2 * (D * C_pad + C_pad) * itemsize
    per_row_bytes = (2 * D + 2 * C) * itemsize + C_pad * 4  # f32 accumulator
    avail = max(block_budget - weight_bytes, per_row_bytes * 8)
    tm_budget = max(8, (avail // per_row_bytes) // 8 * 8)

    TM = min(tm, tm_budget, _round_up(B, 8))
    if B >= 16:
        # Guarantee >= 2 batch tiles so "parallel" can shard across both
        # TensorCores on v7x.
        TM = min(TM, _round_up((B + 1) // 2, 8))
    TM = max(TM, 8)

    grid = (pl.cdiv(B, TM),)

    need_bytes = (
        2 * TM * D * itemsize          # double-buffered x tiles
        + 2 * TM * C * itemsize        # double-buffered output tiles
        + weight_bytes                 # weight + bias blocks
        + TM * C_pad * 4               # f32 accumulator / temporaries
    )
    vmem_limit = int(min(max(2 * need_bytes, 16 * (1 << 20)), 48 * (1 << 20)))

    cost = pl.CostEstimate(
        flops=2 * B * D * C_pad,
        transcendentals=0,
        bytes_accessed=(x.size + w_p.size + b_p.size + B * C) * itemsize,
    )

    out = pl.pallas_call(
        functools.partial(_linear_svm_kernel, num_class=C),
        out_shape=jax.ShapeDtypeStruct((B, C), x.dtype),
        grid=grid,
        in_specs=[
            pl.BlockSpec((TM, D), lambda i: (i, 0)),      # streamed x tile
            pl.BlockSpec((D, C_pad), lambda i: (0, 0)),   # resident weight (D, C_pad)
            pl.BlockSpec((1, C_pad), lambda i: (0, 0)),   # resident bias
        ],
        out_specs=pl.BlockSpec((TM, C), lambda i: (i, 0)),  # unpadded, no post-slice
        compiler_params=pltpu.CompilerParams(
            dimension_semantics=("parallel",),  # megacore-shard batch tiles on v7x
            vmem_limit_bytes=vmem_limit,
        ),
        cost_estimate=cost,
    )(x, w_p, b_p)

    return out


if __name__ == "__main__":
    # Small shapes consistent with LinearSVM(num_class, dim)
    batch, dim, num_class = 8, 32, 10

    key = jax.random.PRNGKey(0)
    kx, kw, kb = jax.random.split(key, 3)

    # Deterministic parameter init (mimics PyTorch uniform(-1/sqrt(dim), 1/sqrt(dim)))
    bound = 1.0 / (dim ** 0.5)
    weight = jax.random.uniform(kw, (num_class, dim), jnp.float32, -bound, bound)
    bias = jax.random.uniform(kb, (num_class,), jnp.float32, -bound, bound)

    x = jax.random.normal(kx, (batch, dim), jnp.float32)

    out = linear_svm_forward(x, weight, bias)
    jax.block_until_ready(out)

    ref = x @ weight.T + bias
    assert out.shape == (batch, num_class)
    assert jnp.allclose(out, ref, atol=1e-5, rtol=1e-5)

    # Exercise the ragged-last-block path (B not a multiple of TM, no x padding).
    x2 = jax.random.normal(kx, (20, dim), jnp.float32)
    out2 = linear_svm_forward(x2, weight, bias)
    jax.block_until_ready(out2)
    ref2 = x2 @ weight.T + bias
    assert out2.shape == (20, num_class)
    assert jnp.allclose(out2, ref2, atol=1e-5, rtol=1e-5)

    print("KERNEL_OK")
</pallas_src>

<mosaic_0001>
module attributes {stable_mosaic.version = 11 : i64} {
  func.func @_linear_svm_kernel(%arg0: i32, %arg1: memref<8x32xf32, #tpu.memory_space<vmem>>, %arg2: memref<32x128xf32, #tpu.memory_space<vmem>>, %arg3: memref<1x128xf32, #tpu.memory_space<vmem>>, %arg4: memref<8x10xf32, #tpu.memory_space<vmem>>) attributes {dimension_semantics = [#tpu.dimension_semantics<parallel>], iteration_bounds = array<i64: 1>, scalar_prefetch = 0 : i64, scratch_operands = 0 : i64, tpu.core_type = #tpu.core_type<tc>, window_params = [{transform_indices = @transform_0, window_bounds = array<i64: 8, 32>}, {pipeline_mode = #tpu.pipeline_mode<synchronous>, transform_indices = @transform_1, window_bounds = array<i64: 32, 128>}, {pipeline_mode = #tpu.pipeline_mode<synchronous>, transform_indices = @transform_2, window_bounds = array<i64: 1, 128>}, {transform_indices = @transform_3, window_bounds = array<i64: 8, 10>}]} {
    %c0 = arith.constant 0 : index
    %c0_0 = arith.constant 0 : index
    %0 = vector.load %arg1[%c0, %c0_0] : memref<8x32xf32, #tpu.memory_space<vmem>>, vector<8x32xf32>
    %c0_1 = arith.constant 0 : index
    %c0_2 = arith.constant 0 : index
    %1 = vector.load %arg2[%c0_1, %c0_2] : memref<32x128xf32, #tpu.memory_space<vmem>>, vector<32x128xf32>
    %cst = arith.constant dense<0.000000e+00> : vector<8x128xf32>
    %2 = tpu.matmul %0, %1, %cst {dimension_numbers = #tpu.dot_dimension_numbers<[1], [0], [0], [1], [0, 0, 1, 1], [], []>} : vector<8x32xf32>, vector<32x128xf32>, vector<8x128xf32> -> vector<8x128xf32>
    %c0_3 = arith.constant 0 : index
    %c0_4 = arith.constant 0 : index
    %3 = vector.load %arg3[%c0_3, %c0_4] : memref<1x128xf32, #tpu.memory_space<vmem>>, vector<1x128xf32>
    %4 = vector.broadcast %3 : vector<1x128xf32> to vector<8x128xf32>
    %5 = arith.addf %2, %4 : vector<8x128xf32>
    %6 = vector.extract_strided_slice %5 {offsets = [0, 0], sizes = [8, 10], strides = [1, 1]} : vector<8x128xf32> to vector<8x10xf32>
    %c0_5 = arith.constant 0 : index
    %c0_6 = arith.constant 0 : index
    %7 = vector.load %arg4[%c0_5, %c0_6] : memref<8x10xf32, #tpu.memory_space<vmem>>, vector<8x10xf32>
    tpu.vector_store %arg4[%c0_5, %c0_6], %6 {strides = array<i32>} : memref<8x10xf32, #tpu.memory_space<vmem>>, vector<8x10xf32>,
    return
  }
  func.func @transform_0(%arg0: i32) -> (i32, i32) {
    %c0_i32 = arith.constant 0 : i32
    %c0_i32_0 = arith.constant 0 : i32
    return %arg0, %c0_i32 : i32, i32
  }
  func.func @transform_1(%arg0: i32) -> (i32, i32) {
    %c0_i32 = arith.constant 0 : i32
    %c0_i32_0 = arith.constant 0 : i32
    %c0_i32_1 = arith.constant 0 : i32
    return %c0_i32, %c0_i32_0 : i32, i32
  }
  func.func @transform_2(%arg0: i32) -> (i32, i32) {
    %c0_i32 = arith.constant 0 : i32
    %c0_i32_0 = arith.constant 0 : i32
    %c0_i32_1 = arith.constant 0 : i32
    return %c0_i32, %c0_i32_0 : i32, i32
  }
  func.func @transform_3(%arg0: i32) -> (i32, i32) {
    %c0_i32 = arith.constant 0 : i32
    %c0_i32_0 = arith.constant 0 : i32
    return %arg0, %c0_i32 : i32, i32
  }
}

</mosaic_0001>

<llo_original>
// kernel: tpu_custom_call.1
$region0: #{tpu_custom_call.1}
  #allocation0 [shape = 'u32[]', space=smem, size = 0x4, offset = 0x4, fixed_abs, tag = 'smem constant byte address 0x4 - core index']
  #allocation1 [shape = 'u32[72,128]{1,0:T(1,128)}', space=vmem, size = 0x9000, scoped, tag = 'internal scratch']
  %s0 = inlined_call_operand.hbm [shape: f32[8,32], index: 0, kind: input, shape index: {}]
  %s1 = inlined_call_operand.hbm [shape: f32[32,128], index: 1, kind: input, shape index: {}]
  %s2 = inlined_call_operand.vmem [shape: f32[1,128], index: 2, kind: input, shape index: {}]
  %s3 = inlined_call_operand.hbm [shape: f32[8,10], index: 3, kind: output, shape index: {}]
  %s4 = sld [smem:[#allocation0]]
  $region30: #{tpu_custom_call.1} parent=0
    _
  %s6 = ssub.s32 1, %s4
  %s7 = scalar_select 0, %s6, %s4
  $region1: #{tpu_custom_call.1} parent=0
    #allocation2 [shape = 'u8[4096]{0}', space=vmem, size = 0x1000, scoped, tag = 'input window, operand 0, single buffered']
    #allocation3 [shape = 's32[1]{0}', space=sflag, size = 0x4, scoped, tag = 'scoped memory for tpu_custom_call.1']
    #allocation4 [shape = 's32[1]{0}', space=sflag, size = 0x4, scoped, tag = 'scoped memory for tpu_custom_call.1']
    #allocation5 [shape = 'u8[16384]{0}', space=vmem, size = 0x4000, scoped, tag = 'input window, operand 1, single buffered']
    #allocation6 [shape = 's32[1]{0}', space=sflag, size = 0x4, scoped, tag = 'scoped memory for tpu_custom_call.1']
    #allocation7 [shape = 'u8[4096]{0}', space=vmem, size = 0x1000, scoped, tag = 'output window, operand 0, single buffered']
    %8 = vsyncpa [#allocation3], 0
    %9 = vsyncpa [#allocation6], 0
    %10 = vsyncpa [#allocation4], 0
    // Predicated region
    $region2: #{tpu_custom_call.1} parent=1 // pred_check
      _
    $region3: #{tpu_custom_call.1} parent=1 // pred_check_branch
      %12 = sbr.rel (0) target = $region5
    $region4: #{tpu_custom_call.1} parent=1 // pred_region
      %14 = vsyncadd [#allocation3], 0
      %s16 = sshll.u32 %s0, 4
      %s17 = int_to_ptr.hbm [resolvable:$true] %s16
      %s18 = sshll.u32 [#allocation2], 4
      %s19 = int_to_ptr.vmem [resolvable:$true] %s18
      %21 = dma.hbm_to_vmem [thread:$0]  %s17, 128, %s19, [#allocation3]
    $region5: #{tpu_custom_call.1} parent=1 // pred_fallthru
      _
    // Predicated region
    $region6: #{tpu_custom_call.1} parent=1 // pred_check
      _
    $region7: #{tpu_custom_call.1} parent=1 // pred_check_branch
      %23 = sbr.rel (0) target = $region9
    $region8: #{tpu_custom_call.1} parent=1 // pred_region
      %25 = vsyncadd [#allocation6], 0
      %s26 = sshll.u32 %s1, 4
      %s27 = int_to_ptr.hbm [resolvable:$true] %s26
      %s28 = sshll.u32 [#allocation5], 4
      %s29 = int_to_ptr.vmem [resolvable:$true] %s28
      %34 = dma.hbm_to_vmem [thread:$0]  %s27, 512, %s29, [#allocation6], 128, 128, 8
    $region9: #{tpu_custom_call.1} parent=1 // pred_fallthru
      _
    // Predicated region
    $region10: #{tpu_custom_call.1} parent=1 // pred_check
      _
    $region11: #{tpu_custom_call.1} parent=1 // pred_check_branch
      %36 = sbr.rel (0) target = $region13
    $region12: #{tpu_custom_call.1} parent=1 // pred_region
      _
    $region13: #{tpu_custom_call.1} parent=1 // pred_fallthru
      _
    // Predicated region
    $region14: #{tpu_custom_call.1} parent=1 // pred_check
      _
    $region15: #{tpu_custom_call.1} parent=1 // pred_check_branch
      %38 = sbr.rel (0) target = $region17
    $region16: #{tpu_custom_call.1} parent=1 // pred_region
      %40 = dma.done [#allocation3], 128
    $region17: #{tpu_custom_call.1} parent=1 // pred_fallthru
      _
    // Predicated region
    $region18: #{tpu_custom_call.1} parent=1 // pred_check
      _
    $region19: #{tpu_custom_call.1} parent=1 // pred_check_branch
      %42 = sbr.rel (0) target = $region21
    $region20: #{tpu_custom_call.1} parent=1 // pred_region
      %44 = dma.done [#allocation6], 512
    $region21: #{tpu_custom_call.1} parent=1 // pred_fallthru
      _
    %v45 = vld [vmem:[#allocation2] sm:$0xff]
    %v46 = vld [vmem:[#allocation5] sm:$0xff]
    %v47 = vld [vmem:[#allocation5 + $0x8] sm:$0xff]
    %v48 = vld [vmem:[#allocation5 + $0x10] sm:$0xff]
    %v49 = vld [vmem:[#allocation5 + $0x18] sm:$0xff]
    %v50 = vld [vmem:[%s2] sm:$0x1]
    %v52 = vperm.slane %v50, 0
    %vm54 = vcmask 261120
    %v56 = vsel %vm54, %v45, 0
    %58 = vmatpush.msra.mxu0 0.0
    %59 = vmatpush.msra.mxu0 0.0
    %60 = vmatpush.msra.mxu0 0.0
    %61 = vmatpush.msra.mxu0 0.0
    %62 = vmatpush.msra.mxu0 0.0
    %63 = vmatpush.msra.mxu0 0.0
    %64 = vmatpush.msra.mxu0 0.0
    %65 = vmatpush.msra.mxu0 0.0
    %66 = vmatpush.msra.mxu0 0.0
    %67 = vmatpush.msra.mxu0 0.0
    %68 = vmatpush.msra.mxu0 0.0
    %69 = vmatpush.msra.mxu0 0.0
    %70 = vmatpush.msra.mxu0 %v49
    %71 = vmatpush.msra.mxu0 %v48
    %72 = vmatpush.msra.mxu0 %v47
    %73 = vmatpush.msra.mxu0 %v46
    %74 = vmatmul.f32.gmra.mxu0 %v56
    %v75 = vpop.f32.mrf.mxu0
    %v76 = vadd.f32 %v52, %v75
    %77 = vdwg.mxu0
    %vm78 = vcmask 80896
    %79 = vst.msk [vmem:[#allocation7] sm:$0xff] %vm78, %v76
    // Predicated region
    $region22: #{tpu_custom_call.1} parent=1 // pred_check
      _
    $region23: #{tpu_custom_call.1} parent=1 // pred_check_branch
      %81 = sbr.rel (0) target = $region25
    $region24: #{tpu_custom_call.1} parent=1 // pred_region
      %83 = vsyncadd [#allocation4], 0
      %s85 = sshll.u32 [#allocation7], 4
      %s86 = int_to_ptr.vmem [resolvable:$true] %s85
      %s87 = sshll.u32 %s3, 4
      %s88 = int_to_ptr.hbm [resolvable:$true] %s87
      %90 = dma.vmem_to_hbm [thread:$0]  %s86, 128, %s88, [#allocation4]
    $region25: #{tpu_custom_call.1} parent=1 // pred_fallthru
      _
    // Predicated region
    $region26: #{tpu_custom_call.1} parent=1 // pred_check
      _
    $region27: #{tpu_custom_call.1} parent=1 // pred_check_branch
      %92 = sbr.rel (0) target = $region29
    $region28: #{tpu_custom_call.1} parent=1 // pred_region
      %94 = dma.done [#allocation4], 128
    $region29: #{tpu_custom_call.1} parent=1 // pred_fallthru
      _
    %95 = vsyncpa [#allocation3], 1
    %96 = vsyncpa [#allocation6], 1
    %97 = vsyncpa [#allocation4], 1

</llo_original>
